<compile_context>
chip_gen: v7x
topology: tpu7x:2x2x1
jax: 0.10.0
libtpu: 0.0.40
codegen_flags: <defaults>
</compile_context>

<pallas_src>
import jax
import jax.numpy as jnp
from jax.experimental import pallas as pl
from jax.experimental.pallas import tpu as pltpu


def mlp_kernel(x_ref, w1_ref, b1_ref, w2_ref, b2_ref, o_ref):
    # First linear (bf16 operands, f32 accumulation on the MXU) + bias + ReLU.
    h = jnp.dot(x_ref[...], w1_ref[...], preferred_element_type=jnp.float32)
    h = h + b1_ref[...]                       # broadcast (1, H) over (TB, H)
    h = jnp.maximum(h, 0.0)                   # ReLU on the VPU
    # Dropout: identity at inference time (no-op).
    # Second linear (bf16 operands, f32 accumulation) + bias + Sigmoid.
    h = h.astype(jnp.bfloat16)
    y = jnp.dot(h, w2_ref[...], preferred_element_type=jnp.float32)
    y = y + b2_ref[...]                       # broadcast (1, O) over (TB, O)
    o_ref[...] = jax.nn.sigmoid(y)            # logistic -> EUP, no VALU divide


def mlp_forward(x, w1, b1, w2, b2, *, tb=128):
    B, F = x.shape
    H = w1.shape[1]
    O = w2.shape[1]

    # bf16 at the call boundary: halves HBM traffic for x and the weights.
    xb = x.astype(jnp.bfloat16)
    w1b = w1.astype(jnp.bfloat16)
    w2b = w2.astype(jnp.bfloat16)
    b1_2d = b1.reshape(1, H).astype(jnp.float32)
    b2_2d = b2.reshape(1, O).astype(jnp.float32)

    # Batch tiling: TB rows per grid step (or the whole batch if it is smaller).
    tb_eff = tb if B >= tb else B
    num_tiles = pl.cdiv(B, tb_eff)
    b_pad = num_tiles * tb_eff
    if b_pad != B:
        xb = jnp.pad(xb, ((0, b_pad - B), (0, 0)))

    cost = pl.CostEstimate(
        flops=2 * b_pad * F * H + 2 * b_pad * H * O,
        transcendentals=b_pad * O,
        bytes_accessed=(b_pad * F * 2 + F * H * 2 + H * O * 2
                        + H * 4 + O * 4 + b_pad * O * 4),
    )

    out = pl.pallas_call(
        mlp_kernel,
        out_shape=jax.ShapeDtypeStruct((b_pad, O), jnp.float32),
        grid=(num_tiles,),
        in_specs=[
            pl.BlockSpec((tb_eff, F), lambda i: (i, 0)),   # x: tiled over batch
            pl.BlockSpec((F, H), lambda i: (0, 0)),        # w1: VMEM-resident
            pl.BlockSpec((1, H), lambda i: (0, 0)),        # b1: VMEM-resident
            pl.BlockSpec((H, O), lambda i: (0, 0)),        # w2: VMEM-resident
            pl.BlockSpec((1, O), lambda i: (0, 0)),        # b2: VMEM-resident
        ],
        out_specs=pl.BlockSpec((tb_eff, O), lambda i: (i, 0)),
        compiler_params=pltpu.CompilerParams(
            dimension_semantics=("parallel",),             # megacore shard on v7x
        ),
        cost_estimate=cost,
    )(xb, w1b, b1_2d, w2b, b2_2d)

    return out[:B]


def reference_forward(x, w1, b1, w2, b2):
    # Matches the kernel's bf16-operand / f32-accumulate arithmetic.
    xb = x.astype(jnp.bfloat16)
    w1b = w1.astype(jnp.bfloat16)
    w2b = w2.astype(jnp.bfloat16)
    h = jnp.dot(xb, w1b, preferred_element_type=jnp.float32) + b1
    h = jnp.maximum(h, 0.0).astype(jnp.bfloat16)
    y = jnp.dot(h, w2b, preferred_element_type=jnp.float32) + b2
    return jax.nn.sigmoid(y)


if __name__ == "__main__":
    # Net(n_feature, n_hidden, n_output); shapes chosen lane-dense per perf review
    # (B >= 128 so the sublane dim is full; H/O multiples of 128 for unmasked stores).
    batch, n_feature, n_hidden, n_output = 256, 256, 128, 128

    key = jax.random.PRNGKey(0)
    kx, k1, k2, k3, k4 = jax.random.split(key, 5)

    x = jax.random.normal(kx, (batch, n_feature), dtype=jnp.float32)

    # Deterministic parameter init (uniform, roughly matching torch Linear default scale).
    bound1 = 1.0 / (n_feature ** 0.5)
    w1 = jax.random.uniform(k1, (n_feature, n_hidden), jnp.float32, -bound1, bound1)
    b1 = jax.random.uniform(k2, (n_hidden,), jnp.float32, -bound1, bound1)
    bound2 = 1.0 / (n_hidden ** 0.5)
    w2 = jax.random.uniform(k3, (n_hidden, n_output), jnp.float32, -bound2, bound2)
    b2 = jax.random.uniform(k4, (n_output,), jnp.float32, -bound2, bound2)

    out = mlp_forward(x, w1, b1, w2, b2)
    out = jax.block_until_ready(out)

    ref = reference_forward(x, w1, b1, w2, b2)
    assert out.shape == (batch, n_output)
    assert jnp.allclose(out, ref, atol=1e-4, rtol=1e-4), "mismatch vs reference"

    print("KERNEL_OK")
</pallas_src>

<mosaic_0001>
module attributes {stable_mosaic.version = 11 : i64} {
  func.func @mlp_kernel(%arg0: i32, %arg1: memref<128x256xbf16, #tpu.memory_space<vmem>>, %arg2: memref<256x128xbf16, #tpu.memory_space<vmem>>, %arg3: memref<1x128xf32, #tpu.memory_space<vmem>>, %arg4: memref<128x128xbf16, #tpu.memory_space<vmem>>, %arg5: memref<1x128xf32, #tpu.memory_space<vmem>>, %arg6: memref<128x128xf32, #tpu.memory_space<vmem>>) attributes {dimension_semantics = [#tpu.dimension_semantics<parallel>], iteration_bounds = array<i64: 2>, scalar_prefetch = 0 : i64, scratch_operands = 0 : i64, tpu.core_type = #tpu.core_type<tc>, window_params = [{transform_indices = @transform_0, window_bounds = array<i64: 128, 256>}, {pipeline_mode = #tpu.pipeline_mode<synchronous>, transform_indices = @transform_1, window_bounds = array<i64: 256, 128>}, {pipeline_mode = #tpu.pipeline_mode<synchronous>, transform_indices = @transform_2, window_bounds = array<i64: 1, 128>}, {pipeline_mode = #tpu.pipeline_mode<synchronous>, transform_indices = @transform_3, window_bounds = array<i64: 128, 128>}, {pipeline_mode = #tpu.pipeline_mode<synchronous>, transform_indices = @transform_4, window_bounds = array<i64: 1, 128>}, {transform_indices = @transform_5, window_bounds = array<i64: 128, 128>}]} {
    %c0 = arith.constant 0 : index
    %c0_0 = arith.constant 0 : index
    %0 = vector.load %arg1[%c0, %c0_0] : memref<128x256xbf16, #tpu.memory_space<vmem>>, vector<128x256xbf16>
    %c0_1 = arith.constant 0 : index
    %c0_2 = arith.constant 0 : index
    %1 = vector.load %arg2[%c0_1, %c0_2] : memref<256x128xbf16, #tpu.memory_space<vmem>>, vector<256x128xbf16>
    %cst = arith.constant dense<0.000000e+00> : vector<128x128xf32>
    %2 = tpu.matmul %0, %1, %cst {dimension_numbers = #tpu.dot_dimension_numbers<[1], [0], [0], [1], [0, 0, 1, 1], [], []>} : vector<128x256xbf16>, vector<256x128xbf16>, vector<128x128xf32> -> vector<128x128xf32>
    %c0_3 = arith.constant 0 : index
    %c0_4 = arith.constant 0 : index
    %3 = vector.load %arg3[%c0_3, %c0_4] : memref<1x128xf32, #tpu.memory_space<vmem>>, vector<1x128xf32>
    %4 = vector.broadcast %3 : vector<1x128xf32> to vector<128x128xf32>
    %5 = arith.addf %2, %4 : vector<128x128xf32>
    %cst_5 = arith.constant 0.000000e+00 : f32
    %6 = vector.broadcast %cst_5 : f32 to vector<128x128xf32>
    %7 = arith.maximumf %5, %6 : vector<128x128xf32>
    %8 = arith.truncf %7 : vector<128x128xf32> to vector<128x128xbf16>
    %c0_6 = arith.constant 0 : index
    %c0_7 = arith.constant 0 : index
    %9 = vector.load %arg4[%c0_6, %c0_7] : memref<128x128xbf16, #tpu.memory_space<vmem>>, vector<128x128xbf16>
    %cst_8 = arith.constant dense<0.000000e+00> : vector<128x128xf32>
    %10 = tpu.matmul %8, %9, %cst_8 {dimension_numbers = #tpu.dot_dimension_numbers<[1], [0], [0], [1], [0, 0, 1, 1], [], []>} : vector<128x128xbf16>, vector<128x128xbf16>, vector<128x128xf32> -> vector<128x128xf32>
    %c0_9 = arith.constant 0 : index
    %c0_10 = arith.constant 0 : index
    %11 = vector.load %arg5[%c0_9, %c0_10] : memref<1x128xf32, #tpu.memory_space<vmem>>, vector<1x128xf32>
    %12 = vector.broadcast %11 : vector<1x128xf32> to vector<128x128xf32>
    %13 = arith.addf %10, %12 : vector<128x128xf32>
    %14 = arith.negf %13 : vector<128x128xf32>
    %15 = math.exp %14 : vector<128x128xf32>
    %cst_11 = arith.constant 1.000000e+00 : f32
    %16 = vector.broadcast %cst_11 : f32 to vector<128x128xf32>
    %17 = arith.addf %16, %15 : vector<128x128xf32>
    %18 = arith.divf %16, %17 : vector<128x128xf32>
    %c0_12 = arith.constant 0 : index
    %c0_13 = arith.constant 0 : index
    %19 = vector.load %arg6[%c0_12, %c0_13] : memref<128x128xf32, #tpu.memory_space<vmem>>, vector<128x128xf32>
    tpu.vector_store %arg6[%c0_12, %c0_13], %18 {strides = array<i32>} : memref<128x128xf32, #tpu.memory_space<vmem>>, vector<128x128xf32>,
    return
  }
  func.func @transform_0(%arg0: i32) -> (i32, i32) {
    %c0_i32 = arith.constant 0 : i32
    %c0_i32_0 = arith.constant 0 : i32
    return %arg0, %c0_i32 : i32, i32
  }
  func.func @transform_1(%arg0: i32) -> (i32, i32) {
    %c0_i32 = arith.constant 0 : i32
    %c0_i32_0 = arith.constant 0 : i32
    %c0_i32_1 = arith.constant 0 : i32
    return %c0_i32, %c0_i32_0 : i32, i32
  }
  func.func @transform_2(%arg0: i32) -> (i32, i32) {
    %c0_i32 = arith.constant 0 : i32
    %c0_i32_0 = arith.constant 0 : i32
    %c0_i32_1 = arith.constant 0 : i32
    return %c0_i32, %c0_i32_0 : i32, i32
  }
  func.func @transform_3(%arg0: i32) -> (i32, i32) {
    %c0_i32 = arith.constant 0 : i32
    %c0_i32_0 = arith.constant 0 : i32
    %c0_i32_1 = arith.constant 0 : i32
    return %c0_i32, %c0_i32_0 : i32, i32
  }
  func.func @transform_4(%arg0: i32) -> (i32, i32) {
    %c0_i32 = arith.constant 0 : i32
    %c0_i32_0 = arith.constant 0 : i32
    %c0_i32_1 = arith.constant 0 : i32
    return %c0_i32, %c0_i32_0 : i32, i32
  }
  func.func @transform_5(%arg0: i32) -> (i32, i32) {
    %c0_i32 = arith.constant 0 : i32
    %c0_i32_0 = arith.constant 0 : i32
    return %arg0, %c0_i32 : i32, i32
  }
}

</mosaic_0001>

<llo_original>
// kernel: tpu_custom_call.1
$region0: #{tpu_custom_call.1}
  #allocation0 [shape = 'u32[]', space=smem, size = 0x4, offset = 0x4, fixed_abs, tag = 'smem constant byte address 0x4 - core index']
  #allocation1 [shape = 'u32[144,128]{1,0:T(1,128)}', space=vmem, size = 0x12000, scoped, tag = 'internal scratch']
  %s0 = inlined_call_operand.hbm [shape: bf16[256,256], index: 0, kind: input, shape index: {}]
  %s1 = inlined_call_operand.hbm [shape: bf16[256,128], index: 1, kind: input, shape index: {}]
  %s2 = inlined_call_operand.vmem [shape: f32[1,128], index: 2, kind: input, shape index: {}]
  %s3 = inlined_call_operand.hbm [shape: bf16[128,128], index: 3, kind: input, shape index: {}]
  %s4 = inlined_call_operand.vmem [shape: f32[1,128], index: 4, kind: input, shape index: {}]
  %s5 = inlined_call_operand.hbm [shape: f32[256,128], index: 5, kind: output, shape index: {}]
  %s6 = sld [smem:[#allocation0]]
  $region65: #{tpu_custom_call.1} parent=0
    _
  %s8 = ssub.s32 1, %s6
  %s9 = scalar_select 0, %s8, %s6
  $region1: #{tpu_custom_call.1} parent=0
    #allocation2 [shape = 'u8[131072]{0}', space=vmem, size = 0x20000, scoped, tag = 'input window, operand 0']
    #allocation3 [shape = 's32[2]{0}', space=sflag, size = 0x8, scoped, tag = 'scoped memory for tpu_custom_call.1']
    #allocation4 [shape = 's32[2]{0}', space=sflag, size = 0x8, scoped, tag = 'scoped memory for tpu_custom_call.1']
    #allocation5 [shape = 'u8[65536]{0}', space=vmem, size = 0x10000, scoped, tag = 'input window, operand 1, single buffered']
    #allocation6 [shape = 's32[1]{0}', space=sflag, size = 0x4, scoped, tag = 'scoped memory for tpu_custom_call.1']
    #allocation7 [shape = 'u8[32768]{0}', space=vmem, size = 0x8000, scoped, tag = 'input window, operand 3, single buffered']
    #allocation8 [shape = 'u8[131072]{0}', space=vmem, size = 0x20000, scoped, tag = 'output window, operand 0']
    %10 = vsyncpa [#allocation3], 0
    %s11 = scalar_lea.sflag [#allocation3], 1
    %12 = vsyncpa %s11, 0
    %13 = vsyncpa [#allocation6], 0
    %14 = vsyncpa [#allocation4], 0
    %s15 = scalar_lea.sflag [#allocation4], 1
    %16 = vsyncpa %s15, 0
    loop: start=0, step=1, limit=4
    $region2: #{tpu_custom_call.1} parent=1 // loop_pre_header
      _
    $region3: #{tpu_custom_call.1} parent=1 // loop_header
      %s18 = sphi 0, %s22
      %p19 = scmp.ge.s32.totalorder %s18, 4
      %s28 = sphi 0, %s30
      %s31 = sphi 0, %s28
      %s32 = sphi 0, %s31
      %s48 = sphi 0, %s32
      %s52 = sphi 0, %s52
      %s54 = sphi 0, %s52
      %s55 = sphi 0, %s54
      %s69 = sphi 0, %s55
      %s73 = sphi 0, %s73
      %s75 = sphi 0, %s73
      %s76 = sphi 0, %s75
      %s90 = sphi 0, %s76
      %s94 = sphi 0, %s94
      %s96 = sphi 0, %s94
      %s97 = sphi 0, %s96
      %s111 = sphi 0, %s97
      %s115 = sphi 0, %s115
      %s117 = sphi 0, %s115
      %s118 = sphi 0, %s117
      %s132 = sphi 0, %s118
      %s138 = sphi 0, %s140
      %s141 = sphi 0, %s138
      %s142 = sphi 0, %s141
      %s158 = sphi 0, %s142
    $region4: #{tpu_custom_call.1} parent=1 // loop_header_branch
      %21 = sbr.rel (%p19) target = $region8
    $region5: #{tpu_custom_call.1} parent=1 // loop_body
      %s23 = ssub.s32 %s18, 1
      %s24 = ssub.s32 %s18, 2
      %s25 = sadd.s32 %s18, 1
      %s26 = ssub.s32 %s18, %s25
      %p27 = scmp.eq.s32.totalorder %s26, 0
      %s29 = sadd.s32 %s28, 1
      %s30 = scalar_select %p27, %s28, %s29
      %p33 = pneg %p27
      %p34 = scmp.eq.s32.totalorder %s18, 1
      %p35 = por %p33, %p34
      %p36 = scmp.ne.s32.totalorder %s28, %s31
      %p37 = scmp.eq.s32.totalorder %s18, 0
      %p38 = por %p36, %p37
      %p39 = scmp.ne.s32.totalorder %s28, %s31
      %p40 = scmp.eq.s32.totalorder %s23, 1
      %p41 = por %p39, %p40
      %p42 = scmp.ne.s32.totalorder %s31, %s32
      %p43 = scmp.eq.s32.totalorder %s23, 0
      %p44 = por %p42, %p43
      %p45 = scmp.ne.s32.totalorder %s31, %s32
      %p46 = scmp.eq.s32.totalorder %s24, 1
      %p47 = por %p45, %p46
      %p49 = scmp.ne.s32.totalorder %s32, %s48
      %p50 = scmp.eq.s32.totalorder %s24, 0
      %p51 = por %p49, %p50
      %s53 = sadd.s32 %s52, 1
      %p56 = scmp.eq.s32.totalorder %s18, 1
      %p57 = scmp.ne.s32.totalorder %s52, %s54
      %p58 = scmp.eq.s32.totalorder %s18, 0
      %p59 = por %p57, %p58
      %p60 = scmp.ne.s32.totalorder %s52, %s54
      %p61 = scmp.eq.s32.totalorder %s23, 1
      %p62 = por %p60, %p61
      %p63 = scmp.ne.s32.totalorder %s54, %s55
      %p64 = scmp.eq.s32.totalorder %s23, 0
      %p65 = por %p63, %p64
      %p66 = scmp.ne.s32.totalorder %s54, %s55
      %p67 = scmp.eq.s32.totalorder %s24, 1
      %p68 = por %p66, %p67
      %p70 = scmp.ne.s32.totalorder %s55, %s69
      %p71 = scmp.eq.s32.totalorder %s24, 0
      %p72 = por %p70, %p71
      %s74 = sadd.s32 %s73, 1
      %p77 = scmp.eq.s32.totalorder %s18, 1
      %p78 = scmp.ne.s32.totalorder %s73, %s75
      %p79 = scmp.eq.s32.totalorder %s18, 0
      %p80 = por %p78, %p79
      %p81 = scmp.ne.s32.totalorder %s73, %s75
      %p82 = scmp.eq.s32.totalorder %s23, 1
      %p83 = por %p81, %p82
      %p84 = scmp.ne.s32.totalorder %s75, %s76
      %p85 = scmp.eq.s32.totalorder %s23, 0
      %p86 = por %p84, %p85
      %p87 = scmp.ne.s32.totalorder %s75, %s76
      %p88 = scmp.eq.s32.totalorder %s24, 1
      %p89 = por %p87, %p88
      %p91 = scmp.ne.s32.totalorder %s76, %s90
      %p92 = scmp.eq.s32.totalorder %s24, 0
      %p93 = por %p91, %p92
      %s95 = sadd.s32 %s94, 1
      %p98 = scmp.eq.s32.totalorder %s18, 1
      %p99 = scmp.ne.s32.totalorder %s94, %s96
      %p100 = scmp.eq.s32.totalorder %s18, 0
      %p101 = por %p99, %p100
      %p102 = scmp.ne.s32.totalorder %s94, %s96
      %p103 = scmp.eq.s32.totalorder %s23, 1
      %p104 = por %p102, %p103
      %p105 = scmp.ne.s32.totalorder %s96, %s97
      %p106 = scmp.eq.s32.totalorder %s23, 0
      %p107 = por %p105, %p106
      %p108 = scmp.ne.s32.totalorder %s96, %s97
      %p109 = scmp.eq.s32.totalorder %s24, 1
      %p110 = por %p108, %p109
      %p112 = scmp.ne.s32.totalorder %s97, %s111
      %p113 = scmp.eq.s32.totalorder %s24, 0
      %p114 = por %p112, %p113
      %s116 = sadd.s32 %s115, 1
      %p119 = scmp.eq.s32.totalorder %s18, 1
      %p120 = scmp.ne.s32.totalorder %s115, %s117
      %p121 = scmp.eq.s32.totalorder %s18, 0
      %p122 = por %p120, %p121
      %p123 = scmp.ne.s32.totalorder %s115, %s117
      %p124 = scmp.eq.s32.totalorder %s23, 1
      %p125 = por %p123, %p124
      %p126 = scmp.ne.s32.totalorder %s117, %s118
      %p127 = scmp.eq.s32.totalorder %s23, 0
      %p128 = por %p126, %p127
      %p129 = scmp.ne.s32.totalorder %s117, %s118
      %p130 = scmp.eq.s32.totalorder %s24, 1
      %p131 = por %p129, %p130
      %p133 = scmp.ne.s32.totalorder %s118, %s132
      %p134 = scmp.eq.s32.totalorder %s24, 0
      %p135 = por %p133, %p134
      %s136 = ssub.s32 %s18, %s25
      %p137 = scmp.eq.s32.totalorder %s136, 0
      %s139 = sadd.s32 %s138, 1
      %s140 = scalar_select %p137, %s138, %s139
      %p143 = pneg %p137
      %p144 = scmp.eq.s32.totalorder %s18, 1
      %p145 = por %p143, %p144
      %p146 = scmp.ne.s32.totalorder %s138, %s141
      %p147 = scmp.eq.s32.totalorder %s18, 0
      %p148 = por %p146, %p147
      %p149 = scmp.ne.s32.totalorder %s138, %s141
      %p150 = scmp.eq.s32.totalorder %s23, 1
      %p151 = por %p149, %p150
      %p152 = scmp.ne.s32.totalorder %s141, %s142
      %p153 = scmp.eq.s32.totalorder %s23, 0
      %p154 = por %p152, %p153
      %p155 = scmp.ne.s32.totalorder %s141, %s142
      %p156 = scmp.eq.s32.totalorder %s24, 1
      %p157 = por %p155, %p156
      %p159 = scmp.ne.s32.totalorder %s142, %s158
      %p160 = scmp.eq.s32.totalorder %s24, 0
      %p161 = por %p159, %p160
      %p162 = scmp.le.s32.totalorder 1, %s18
      %p163 = scmp.lt.s32.totalorder %s18, 3
      %p164 = pnand %p162, %p163
      %p165 = pneg %p164
      // Predicated region
      $region9: #{tpu_custom_call.1} parent=5 // pred_check
        _
      $region10: #{tpu_custom_call.1} parent=5 // pred_check_branch
        %167 = sbr.rel (%p164) target = $region12
      $region11: #{tpu_custom_call.1} parent=5 // pred_region
        %s168 = ssub.s32 %s18, 1
        // Predicated region
        $region13: #{tpu_custom_call.1} parent=11 // pred_check
          %p169 = pneg %p65
        $region14: #{tpu_custom_call.1} parent=11 // pred_check_branch
          %171 = sbr.rel (%p169) target = $region16
        $region15: #{tpu_custom_call.1} parent=11 // pred_region
          %s173 = ssub.s32 2048, 2048
          %174 = vsyncadd [#allocation6], %s173
          %s175 = sshll.u32 [#allocation5], 4
          %s176 = int_to_ptr.vmem [resolvable:$true] %s175
          %181 = dma.hbm_to_vmem [thread:$0]  %s1, 2048, %s176, [#allocation6], 64, 64, 4
        $region16: #{tpu_custom_call.1} parent=11 // pred_fallthru
          _
        // Predicated region
        $region17: #{tpu_custom_call.1} parent=11 // pred_check
          %p182 = pneg %p86
        $region18: #{tpu_custom_call.1} parent=11 // pred_check_branch
          %184 = sbr.rel (%p182) target = $region20
        $region19: #{tpu_custom_call.1} parent=11 // pred_region
          _
        $region20: #{tpu_custom_call.1} parent=11 // pred_fallthru
          _
        // Predicated region
        $region21: #{tpu_custom_call.1} parent=11 // pred_check
          %p185 = pneg %p107
        $region22: #{tpu_custom_call.1} parent=11 // pred_check_branch
          %187 = sbr.rel (%p185) target = $region24
        $region23: #{tpu_custom_call.1} parent=11 // pred_region
          %s189 = ssub.s32 1024, 1024
          %190 = vsyncadd [#allocation6], %s189
          %s191 = sshll.u32 [#allocation7], 4
          %s192 = int_to_ptr.vmem [resolvable:$true] %s191
          %197 = dma.hbm_to_vmem [thread:$0]  %s3, 1024, %s192, [#allocation6], 64, 64, 4
        $region24: #{tpu_custom_call.1} parent=11 // pred_fallthru
          _
        // Predicated region
        $region25: #{tpu_custom_call.1} parent=11 // pred_check
          %p198 = pneg %p128
        $region26: #{tpu_custom_call.1} parent=11 // pred_check_branch
          %200 = sbr.rel (%p198) target = $region28
        $region27: #{tpu_custom_call.1} parent=11 // pred_region
          _
        $region28: #{tpu_custom_call.1} parent=11 // pred_fallthru
          _
      $region12: #{tpu_custom_call.1} parent=5 // pred_fallthru
        _
      %p201 = scmp.lt.s32.totalorder %s18, 2
      // Predicated region
      $region29: #{tpu_custom_call.1} parent=5 // pred_check
        %p202 = pneg %p201
      $region30: #{tpu_custom_call.1} parent=5 // pred_check_branch
        %204 = sbr.rel (%p202) target = $region32
      $region31: #{tpu_custom_call.1} parent=5 // pred_region
        // Predicated region
        $region33: #{tpu_custom_call.1} parent=31 // pred_check
          %p205 = pneg %p38
        $region34: #{tpu_custom_call.1} parent=31 // pred_check_branch
          %207 = sbr.rel (%p205) target = $region36
        $region35: #{tpu_custom_call.1} parent=31 // pred_region
          %s208 = sand.u32 %s28, 1
          %s209 = scalar_lea.sflag [#allocation3], %s208
          %s210 = sand.u32 %s28, 1
          %s211 = smul.addr %s210, 128
          %s212 = scalar_lea.vmem [#allocation2], %s211
          %s213 = smul.u32 16, %s18
          %s215 = ssub.s32 2048, 2048
          %216 = vsyncadd %s209, %s215
          %s217 = smul.addr %s213, 2
          %s218 = smul.addr %s217, 64
          %s219 = scalar_lea.hbm %s0, %s218
          %s220 = sshll.u32 %s212, 4
          %s221 = int_to_ptr.vmem [resolvable:$true] %s220
          %226 = dma.hbm_to_vmem [thread:$0]  %s219, 2048, %s221, %s209, 128, 128, 8
        $region36: #{tpu_custom_call.1} parent=31 // pred_fallthru
          _
      $region32: #{tpu_custom_call.1} parent=5 // pred_fallthru
        _
      %p227 = scmp.le.s32.totalorder 1, %s18
      %p228 = scmp.lt.s32.totalorder %s18, 3
      %p229 = pnand %p227, %p228
      %p230 = pneg %p229
      // Predicated region
      $region37: #{tpu_custom_call.1} parent=5 // pred_check
        _
      $region38: #{tpu_custom_call.1} parent=5 // pred_check_branch
        %232 = sbr.rel (%p229) target = $region40
      $region39: #{tpu_custom_call.1} parent=5 // pred_region
        %s233 = ssub.s32 %s18, 1
        %s234 = sand.u32 %s31, 1
        %s235 = scalar_lea.sflag [#allocation3], %s234
        %s236 = sand.u32 %s31, 1
        %s237 = smul.addr %s236, 128
        %s238 = scalar_lea.vmem [#allocation2], %s237
        // Predicated region
        $region41: #{tpu_custom_call.1} parent=39 // pred_check
          %p239 = pneg %p44
        $region42: #{tpu_custom_call.1} parent=39 // pred_check_branch
          %241 = sbr.rel (%p239) target = $region44
        $region43: #{tpu_custom_call.1} parent=39 // pred_region
          %242 = dma.done %s235, 2048
        $region44: #{tpu_custom_call.1} parent=39 // pred_fallthru
          _
        // Predicated region
        $region45: #{tpu_custom_call.1} parent=39 // pred_check
          %p243 = pneg %p65
        $region46: #{tpu_custom_call.1} parent=39 // pred_check_branch
          %245 = sbr.rel (%p243) target = $region48
        $region47: #{tpu_custom_call.1} parent=39 // pred_region
          %246 = dma.done [#allocation6], 2048
        $region48: #{tpu_custom_call.1} parent=39 // pred_fallthru
          _
        // Predicated region
        $region49: #{tpu_custom_call.1} parent=39 // pred_check
          %p247 = pneg %p107
        $region50: #{tpu_custom_call.1} parent=39 // pred_check_branch
          %249 = sbr.rel (%p247) target = $region52
        $region51: #{tpu_custom_call.1} parent=39 // pred_region
          %250 = dma.done [#allocation6], 1024
        $region52: #{tpu_custom_call.1} parent=39 // pred_fallthru
          _
        %s251 = sand.u32 %s31, 1
        %s252 = scalar_lea.sflag [#allocation3], %s251
        %s253 = sand.u32 %s31, 1
        %s254 = smul.addr %s253, 128
        %s255 = scalar_lea.vmem [#allocation2], %s254
        %p256 = pneg %p44
        %p257 = pneg %p41
        %p258 = pneg %p65
        %p259 = pneg %p62
        %p260 = pneg %p86
        %p261 = pneg %p83
        %p262 = pneg %p107
        %p263 = pneg %p104
        %p264 = pneg %p128
        %p265 = pneg %p125
        %p266 = pneg %p154
        %p267 = pneg %p151
        %s268 = sand.u32 %s141, 1
        %s269 = scalar_lea.sflag [#allocation4], %s268
        %s270 = sand.u32 %s141, 1
        %s271 = smul.addr %s270, 128
        %s272 = scalar_lea.vmem [#allocation8], %s271
        %s273 = smul.u32 16, %s23
        %s274 = smul.u32 16, %s23
        %v276 = vld [vmem:[%s238] sm:$0xff]
        %v277 = vld [vmem:[%s238 + $0x8] sm:$0xff]
        %v278 = vld [vmem:[%s238 + $0x10] sm:$0xff]
        %v279 = vld [vmem:[%s238 + $0x18] sm:$0xff]
        %v280 = vld [vmem:[%s238 + $0x20] sm:$0xff]
        %v281 = vld [vmem:[%s238 + $0x28] sm:$0xff]
        %v282 = vld [vmem:[%s238 + $0x30] sm:$0xff]
        %v283 = vld [vmem:[%s238 + $0x38] sm:$0xff]
        %v284 = vld [vmem:[%s238 + $0x40] sm:$0xff]
        %v285 = vld [vmem:[%s238 + $0x48] sm:$0xff]
        %v286 = vld [vmem:[%s238 + $0x50] sm:$0xff]
        %v287 = vld [vmem:[%s238 + $0x58] sm:$0xff]
        %v288 = vld [vmem:[%s238 + $0x60] sm:$0xff]
        %v289 = vld [vmem:[%s238 + $0x68] sm:$0xff]
        %v290 = vld [vmem:[%s238 + $0x70] sm:$0xff]
        %v291 = vld [vmem:[%s238 + $0x78] sm:$0xff]
        %v292 = vld [vmem:[#allocation5] sm:$0xf]
        %v293 = vld [vmem:[#allocation5 + $0x4] sm:$0xf]
        %v294 = vld [vmem:[#allocation5 + $0x8] sm:$0xf]
        %v295 = vld [vmem:[#allocation5 + $0xc] sm:$0xf]
        %v296 = vld [vmem:[#allocation5 + $0x10] sm:$0xf]
        %v297 = vld [vmem:[#allocation5 + $0x14] sm:$0xf]
        %v298 = vld [vmem:[#allocation5 + $0x18] sm:$0xf]
        %v299 = vld [vmem:[#allocation5 + $0x1c] sm:$0xf]
        %v300 = vld [vmem:[#allocation5 + $0x20] sm:$0xf]
        %v301 = vld [vmem:[#allocation5 + $0x24] sm:$0xf]
        %v302 = vld [vmem:[#allocation5 + $0x28] sm:$0xf]
        %v303 = vld [vmem:[#allocation5 + $0x2c] sm:$0xf]
        %v304 = vld [vmem:[#allocation5 + $0x30] sm:$0xf]
        %v305 = vld [vmem:[#allocation5 + $0x34] sm:$0xf]
        %v306 = vld [vmem:[#allocation5 + $0x38] sm:$0xf]
        %v307 = vld [vmem:[#allocation5 + $0x3c] sm:$0xf]
        %v308 = vld [vmem:[#allocation5 + $0x40] sm:$0xf]
        %v309 = vld [vmem:[#allocation5 + $0x44] sm:$0xf]
        %v310 = vld [vmem:[#allocation5 + $0x48] sm:$0xf]
        %v311 = vld [vmem:[#allocation5 + $0x4c] sm:$0xf]
        %v312 = vld [vmem:[#allocation5 + $0x50] sm:$0xf]
        %v313 = vld [vmem:[#allocation5 + $0x54] sm:$0xf]
        %v314 = vld [vmem:[#allocation5 + $0x58] sm:$0xf]
        %v315 = vld [vmem:[#allocation5 + $0x5c] sm:$0xf]
        %v316 = vld [vmem:[#allocation5 + $0x60] sm:$0xf]
        %v317 = vld [vmem:[#allocation5 + $0x64] sm:$0xf]
        %v318 = vld [vmem:[#allocation5 + $0x68] sm:$0xf]
        %v319 = vld [vmem:[#allocation5 + $0x6c] sm:$0xf]
        %v320 = vld [vmem:[#allocation5 + $0x70] sm:$0xf]
        %v321 = vld [vmem:[#allocation5 + $0x74] sm:$0xf]
        %v322 = vld [vmem:[#allocation5 + $0x78] sm:$0xf]
        %v323 = vld [vmem:[#allocation5 + $0x7c] sm:$0xf]
        %v324 = vld [vmem:[%s2] sm:$0x1]
        %v326 = vlaneseq
        %v327 = vshrl.u32 %v326, 7
        %v328 = vsub.s32 0, %v327
        %v329 = vrot.slane %v324, %v328
        %v347 = vunpack.c.l.b16 %v276
        %v348 = vunpack.c.h.b16 %v276
        %v349 = vunpack.c.l.b16 %v277
        %v350 = vunpack.c.h.b16 %v277
        %v351 = vunpack.c.l.b16 %v278
        %v352 = vunpack.c.h.b16 %v278
        %v353 = vunpack.c.l.b16 %v279
        %v354 = vunpack.c.h.b16 %v279
        %v355 = vunpack.c.l.b16 %v280
        %v356 = vunpack.c.h.b16 %v280
        %v357 = vunpack.c.l.b16 %v281
        %v358 = vunpack.c.h.b16 %v281
        %v359 = vunpack.c.l.b16 %v282
        %v360 = vunpack.c.h.b16 %v282
        %v361 = vunpack.c.l.b16 %v283
        %v362 = vunpack.c.h.b16 %v283
        %v363 = vunpack.c.l.b16 %v284
        %v364 = vunpack.c.h.b16 %v284
        %v365 = vunpack.c.l.b16 %v285
        %v366 = vunpack.c.h.b16 %v285
        %v367 = vunpack.c.l.b16 %v286
        %v368 = vunpack.c.h.b16 %v286
        %v369 = vunpack.c.l.b16 %v287
        %v370 = vunpack.c.h.b16 %v287
        %v371 = vunpack.c.l.b16 %v288
        %v372 = vunpack.c.h.b16 %v288
        %v373 = vunpack.c.l.b16 %v289
        %v374 = vunpack.c.h.b16 %v289
        %v375 = vunpack.c.l.b16 %v290
        %v376 = vunpack.c.h.b16 %v290
        %v377 = vunpack.c.l.b16 %v291
        %v378 = vunpack.c.h.b16 %v291
        %v379 = vpack.c.b16 %v349, %v347
        %v380 = vpack.c.b16 %v350, %v348
        %v381 = vpack.c.b16 %v353, %v351
        %v382 = vpack.c.b16 %v354, %v352
        %v383 = vpack.c.b16 %v357, %v355
        %v384 = vpack.c.b16 %v358, %v356
        %v385 = vpack.c.b16 %v361, %v359
        %v386 = vpack.c.b16 %v362, %v360
        %v387 = vpack.c.b16 %v365, %v363
        %v388 = vpack.c.b16 %v366, %v364
        %v389 = vpack.c.b16 %v369, %v367
        %v390 = vpack.c.b16 %v370, %v368
        %v391 = vpack.c.b16 %v373, %v371
        %v392 = vpack.c.b16 %v374, %v372
        %v393 = vpack.c.b16 %v377, %v375
        %v394 = vpack.c.b16 %v378, %v376
        %v443 = vunpack.c.l.b16 %v292
        %v444 = vunpack.c.l.b16 %v293
        %v445 = vunpack.c.l.b16 %v294
        %v446 = vunpack.c.l.b16 %v295
        %v447 = vunpack.c.l.b16 %v296
        %v448 = vunpack.c.l.b16 %v297
        %v449 = vunpack.c.l.b16 %v298
        %v450 = vunpack.c.l.b16 %v299
        %v451 = vunpack.c.l.b16 %v300
        %v452 = vunpack.c.l.b16 %v301
        %v453 = vunpack.c.l.b16 %v302
        %v454 = vunpack.c.l.b16 %v303
        %v455 = vunpack.c.l.b16 %v304
        %v456 = vunpack.c.l.b16 %v305
        %v457 = vunpack.c.l.b16 %v306
        %v458 = vunpack.c.l.b16 %v307
        %v459 = vunpack.c.l.b16 %v308
        %v460 = vunpack.c.l.b16 %v309
        %v461 = vunpack.c.l.b16 %v310
        %v462 = vunpack.c.l.b16 %v311
        %v463 = vunpack.c.l.b16 %v312
        %v464 = vunpack.c.l.b16 %v313
        %v465 = vunpack.c.l.b16 %v314
        %v466 = vunpack.c.l.b16 %v315
        %v467 = vunpack.c.l.b16 %v316
        %v468 = vunpack.c.l.b16 %v317
        %v469 = vunpack.c.l.b16 %v318
        %v470 = vunpack.c.l.b16 %v319
        %v471 = vunpack.c.l.b16 %v320
        %v472 = vunpack.c.l.b16 %v321
        %v473 = vunpack.c.l.b16 %v322
        %v474 = vunpack.c.l.b16 %v323
        %v475 = vpack.c.b16 %v444, %v443
        %v476 = vpack.c.b16 %v446, %v445
        %v477 = vpack.c.b16 %v448, %v447
        %v478 = vpack.c.b16 %v450, %v449
        %v479 = vpack.c.b16 %v452, %v451
        %v480 = vpack.c.b16 %v454, %v453
        %v481 = vpack.c.b16 %v456, %v455
        %v482 = vpack.c.b16 %v458, %v457
        %v483 = vpack.c.b16 %v460, %v459
        %v484 = vpack.c.b16 %v462, %v461
        %v485 = vpack.c.b16 %v464, %v463
        %v486 = vpack.c.b16 %v466, %v465
        %v487 = vpack.c.b16 %v468, %v467
        %v488 = vpack.c.b16 %v470, %v469
        %v489 = vpack.c.b16 %v472, %v471
        %v490 = vpack.c.b16 %v474, %v473
        %507 = vmatprep.subr.bf16.mxu0 0
        %508 = vmatpush1.bf16.msra.mxu0 %v475
        %509 = vmatprep.subr.bf16.mxu0 0
        %510 = vmatpush1.bf16.msra.mxu0 %v476
        %511 = vmatprep.subr.bf16.mxu0 0
        %512 = vmatpush1.bf16.msra.mxu0 %v477
        %513 = vmatprep.subr.bf16.mxu0 0
        %514 = vmatpush1.bf16.msra.mxu0 %v478
        %515 = vmatprep.subr.bf16.mxu0 0
        %516 = vmatpush1.bf16.msra.mxu0 %v479
        %517 = vmatprep.subr.bf16.mxu0 0
        %518 = vmatpush1.bf16.msra.mxu0 %v480
        %519 = vmatprep.subr.bf16.mxu0 0
        %520 = vmatpush1.bf16.msra.mxu0 %v481
        %521 = vmatprep.subr.bf16.mxu0 0
        %522 = vmatpush1.bf16.msra.mxu0 %v482
        %523 = vmatprep.subr.bf16.mxu0 0
        %524 = vmatpush1.bf16.msra.mxu0 %v483
        %525 = vmatprep.subr.bf16.mxu0 0
        %526 = vmatpush1.bf16.msra.mxu0 %v484
        %527 = vmatprep.subr.bf16.mxu0 0
        %528 = vmatpush1.bf16.msra.mxu0 %v485
        %529 = vmatprep.subr.bf16.mxu0 0
        %530 = vmatpush1.bf16.msra.mxu0 %v486
        %531 = vmatprep.subr.bf16.mxu0 0
        %532 = vmatpush1.bf16.msra.mxu0 %v487
        %533 = vmatprep.subr.bf16.mxu0 0
        %534 = vmatpush1.bf16.msra.mxu0 %v488
        %535 = vmatprep.subr.bf16.mxu0 0
        %536 = vmatpush1.bf16.msra.mxu0 %v489
        %537 = vmatprep.subr.bf16.mxu0 0
        %538 = vmatpush1.bf16.msra.mxu0 %v490
        %539 = vmatprep.mubr.bf16.mxu0 %v380
        %540 = vmatmul.mubr.bf16.gmra.mrb[0].mxu0 %v379
        %v541 = vpop.f32.mrb[0].mxu0
        %v542 = vadd.f32 %v329, %v541
        %v543 = vpop.f32.mrb[0].mxu0
        %v544 = vpop.f32.mrb[0].mxu0
        %v545 = vadd.f32 %v329, %v544
        %v546 = vpop.f32.mrb[0].mxu0
        %547 = vmatprep.mubr.bf16.mxu0 %v382
        %548 = vmatmul.mubr.bf16.gmra.mrb[0].mxu0 %v381
        %v549 = vpop.f32.mrb[0].mxu0
        %v550 = vadd.f32 %v329, %v549
        %v551 = vpop.f32.mrb[0].mxu0
        %v552 = vpop.f32.mrb[0].mxu0
        %v553 = vadd.f32 %v329, %v552
        %v554 = vpop.f32.mrb[0].mxu0
        %555 = vmatprep.mubr.bf16.mxu0 %v384
        %556 = vmatmul.mubr.bf16.gmra.mrb[0].mxu0 %v383
        %v557 = vpop.f32.mrb[0].mxu0
        %v558 = vadd.f32 %v329, %v557
        %v559 = vpop.f32.mrb[0].mxu0
        %v560 = vpop.f32.mrb[0].mxu0
        %v561 = vadd.f32 %v329, %v560
        %v562 = vpop.f32.mrb[0].mxu0
        %563 = vmatprep.mubr.bf16.mxu0 %v386
        %564 = vmatmul.mubr.bf16.gmra.mrb[0].mxu0 %v385
        %v565 = vpop.f32.mrb[0].mxu0
        %v566 = vadd.f32 %v329, %v565
        %v567 = vpop.f32.mrb[0].mxu0
        %v568 = vpop.f32.mrb[0].mxu0
        %v569 = vadd.f32 %v329, %v568
        %v570 = vpop.f32.mrb[0].mxu0
        %571 = vmatprep.mubr.bf16.mxu0 %v388
        %572 = vmatmul.mubr.bf16.gmra.mrb[0].mxu0 %v387
        %v573 = vpop.f32.mrb[0].mxu0
        %v574 = vadd.f32 %v329, %v573
        %v575 = vpop.f32.mrb[0].mxu0
        %v576 = vpop.f32.mrb[0].mxu0
        %v577 = vadd.f32 %v329, %v576
        %v578 = vpop.f32.mrb[0].mxu0
        %579 = vmatprep.mubr.bf16.mxu0 %v390
        %580 = vmatmul.mubr.bf16.gmra.mrb[0].mxu0 %v389
        %v581 = vpop.f32.mrb[0].mxu0
        %v582 = vadd.f32 %v329, %v581
        %v583 = vpop.f32.mrb[0].mxu0
        %v584 = vpop.f32.mrb[0].mxu0
        %v585 = vadd.f32 %v329, %v584
        %v586 = vpop.f32.mrb[0].mxu0
        %587 = vmatprep.mubr.bf16.mxu0 %v392
        %588 = vmatmul.mubr.bf16.gmra.mrb[0].mxu0 %v391
        %v589 = vpop.f32.mrb[0].mxu0
        %v590 = vadd.f32 %v329, %v589
        %v591 = vpop.f32.mrb[0].mxu0
        %v592 = vpop.f32.mrb[0].mxu0
        %v593 = vadd.f32 %v329, %v592
        %v594 = vpop.f32.mrb[0].mxu0
        %595 = vmatprep.mubr.bf16.mxu0 %v394
        %596 = vmatmul.mubr.bf16.gmra.mrb[0].mxu0 %v393
        %v597 = vpop.f32.mrb[0].mxu0
        %v598 = vadd.f32 %v329, %v597
        %v599 = vpop.f32.mrb[0].mxu0
        %v600 = vpop.f32.mrb[0].mxu0
        %v601 = vadd.f32 %v329, %v600
        %v602 = vpop.f32.mrb[0].mxu0
        %603 = vdwg.mxu0
        %v604 = vmax.f32 %v542, 0.0
        %v605 = vmax.f32 %v545, 0.0
        %v606 = vmax.f32 %v550, 0.0
        %v607 = vmax.f32 %v553, 0.0
        %v608 = vmax.f32 %v558, 0.0
        %v609 = vmax.f32 %v561, 0.0
        %v610 = vmax.f32 %v566, 0.0
        %v611 = vmax.f32 %v569, 0.0
        %v612 = vmax.f32 %v574, 0.0
        %v613 = vmax.f32 %v577, 0.0
        %v614 = vmax.f32 %v582, 0.0
        %v615 = vmax.f32 %v585, 0.0
        %v616 = vmax.f32 %v590, 0.0
        %v617 = vmax.f32 %v593, 0.0
        %v618 = vmax.f32 %v598, 0.0
        %v619 = vmax.f32 %v601, 0.0
        %v620 = vpack.c.bf16 %v605, %v604
        %v621 = vpack.c.bf16 %v607, %v606
        %v622 = vpack.c.bf16 %v609, %v608
        %v623 = vpack.c.bf16 %v611, %v610
        %v624 = vpack.c.bf16 %v613, %v612
        %v625 = vpack.c.bf16 %v615, %v614
        %v626 = vpack.c.bf16 %v617, %v616
        %v627 = vpack.c.bf16 %v619, %v618
        %v628 = vld [vmem:[#allocation7] sm:$0xf]
        %v629 = vld [vmem:[#allocation7 + $0x4] sm:$0xf]
        %v630 = vld [vmem:[#allocation7 + $0x8] sm:$0xf]
        %v631 = vld [vmem:[#allocation7 + $0xc] sm:$0xf]
        %v632 = vld [vmem:[#allocation7 + $0x10] sm:$0xf]
        %v633 = vld [vmem:[#allocation7 + $0x14] sm:$0xf]
        %v634 = vld [vmem:[#allocation7 + $0x18] sm:$0xf]
        %v635 = vld [vmem:[#allocation7 + $0x1c] sm:$0xf]
        %v636 = vld [vmem:[#allocation7 + $0x20] sm:$0xf]
        %v637 = vld [vmem:[#allocation7 + $0x24] sm:$0xf]
        %v638 = vld [vmem:[#allocation7 + $0x28] sm:$0xf]
        %v639 = vld [vmem:[#allocation7 + $0x2c] sm:$0xf]
        %v640 = vld [vmem:[#allocation7 + $0x30] sm:$0xf]
        %v641 = vld [vmem:[#allocation7 + $0x34] sm:$0xf]
        %v642 = vld [vmem:[#allocation7 + $0x38] sm:$0xf]
        %v643 = vld [vmem:[#allocation7 + $0x3c] sm:$0xf]
        %v644 = vld [vmem:[%s4] sm:$0x1]
        %v646 = vlaneseq
        %v647 = vshrl.u32 %v646, 7
        %v648 = vsub.s32 0, %v647
        %v649 = vrot.slane %v644, %v648
        %v667 = vunpack.c.l.b16 %v628
        %v668 = vunpack.c.l.b16 %v629
        %v669 = vunpack.c.l.b16 %v630
        %v670 = vunpack.c.l.b16 %v631
        %v671 = vunpack.c.l.b16 %v632
        %v672 = vunpack.c.l.b16 %v633
        %v673 = vunpack.c.l.b16 %v634
        %v674 = vunpack.c.l.b16 %v635
        %v675 = vunpack.c.l.b16 %v636
        %v676 = vunpack.c.l.b16 %v637
        %v677 = vunpack.c.l.b16 %v638
        %v678 = vunpack.c.l.b16 %v639
        %v679 = vunpack.c.l.b16 %v640
        %v680 = vunpack.c.l.b16 %v641
        %v681 = vunpack.c.l.b16 %v642
        %v682 = vunpack.c.l.b16 %v643
        %v683 = vpack.c.b16 %v668, %v667
        %v684 = vpack.c.b16 %v670, %v669
        %v685 = vpack.c.b16 %v672, %v671
        %v686 = vpack.c.b16 %v674, %v673
        %v687 = vpack.c.b16 %v676, %v675
        %v688 = vpack.c.b16 %v678, %v677
        %v689 = vpack.c.b16 %v680, %v679
        %v690 = vpack.c.b16 %v682, %v681
        %699 = vmatprep.subr.bf16.mxu0 0
        %700 = vmatpush1.bf16.msra.mxu0 %v683
        %701 = vmatprep.subr.bf16.mxu0 0
        %702 = vmatpush1.bf16.msra.mxu0 %v684
        %703 = vmatprep.subr.bf16.mxu0 0
        %704 = vmatpush1.bf16.msra.mxu0 %v685
        %705 = vmatprep.subr.bf16.mxu0 0
        %706 = vmatpush1.bf16.msra.mxu0 %v686
        %707 = vmatprep.subr.bf16.mxu0 0
        %708 = vmatpush1.bf16.msra.mxu0 %v687
        %709 = vmatprep.subr.bf16.mxu0 0
        %710 = vmatpush1.bf16.msra.mxu0 %v688
        %711 = vmatprep.subr.bf16.mxu0 0
        %712 = vmatpush1.bf16.msra.mxu0 %v689
        %713 = vmatprep.subr.bf16.mxu0 0
        %714 = vmatpush1.bf16.msra.mxu0 %v690
        %715 = vmatprep.subr.bf16.mxu0 0
        %716 = vmatpush1.bf16.msra.mxu0 0
        %717 = vmatprep.subr.bf16.mxu0 0
        %718 = vmatpush1.bf16.msra.mxu0 0
        %719 = vmatprep.subr.bf16.mxu0 0
        %720 = vmatpush1.bf16.msra.mxu0 0
        %721 = vmatprep.subr.bf16.mxu0 0
        %722 = vmatpush1.bf16.msra.mxu0 0
        %723 = vmatprep.subr.bf16.mxu0 0
        %724 = vmatpush1.bf16.msra.mxu0 0
        %725 = vmatprep.subr.bf16.mxu0 0
        %726 = vmatpush1.bf16.msra.mxu0 0
        %727 = vmatprep.subr.bf16.mxu0 0
        %728 = vmatpush1.bf16.msra.mxu0 0
        %729 = vmatprep.subr.bf16.mxu0 0
        %730 = vmatpush1.bf16.msra.mxu0 0
        %731 = vmatprep.mubr.bf16.mxu0 0
        %732 = vmatmul.mubr.bf16.gmra.mrb[0].mxu0 %v620
        %v733 = vpop.f32.mrb[0].mxu0
        %v734 = vadd.f32 %v649, %v733
        %v735 = vpop.f32.mrb[0].mxu0
        %v736 = vpop.f32.mrb[0].mxu0
        %v737 = vadd.f32 %v649, %v736
        %v738 = vpop.f32.mrb[0].mxu0
        %739 = vmatprep.mubr.bf16.mxu0 0
        %740 = vmatmul.mubr.bf16.gmra.mrb[0].mxu0 %v621
        %v741 = vpop.f32.mrb[0].mxu0
        %v742 = vadd.f32 %v649, %v741
        %v743 = vpop.f32.mrb[0].mxu0
        %v744 = vpop.f32.mrb[0].mxu0
        %v745 = vadd.f32 %v649, %v744
        %v746 = vpop.f32.mrb[0].mxu0
        %747 = vmatprep.mubr.bf16.mxu0 0
        %748 = vmatmul.mubr.bf16.gmra.mrb[0].mxu0 %v622
        %v749 = vpop.f32.mrb[0].mxu0
        %v750 = vadd.f32 %v649, %v749
        %v751 = vpop.f32.mrb[0].mxu0
        %v752 = vpop.f32.mrb[0].mxu0
        %v753 = vadd.f32 %v649, %v752
        %v754 = vpop.f32.mrb[0].mxu0
        %755 = vmatprep.mubr.bf16.mxu0 0
        %756 = vmatmul.mubr.bf16.gmra.mrb[0].mxu0 %v623
        %v757 = vpop.f32.mrb[0].mxu0
        %v758 = vadd.f32 %v649, %v757
        %v759 = vpop.f32.mrb[0].mxu0
        %v760 = vpop.f32.mrb[0].mxu0
        %v761 = vadd.f32 %v649, %v760
        %v762 = vpop.f32.mrb[0].mxu0
        %763 = vmatprep.mubr.bf16.mxu0 0
        %764 = vmatmul.mubr.bf16.gmra.mrb[0].mxu0 %v624
        %v765 = vpop.f32.mrb[0].mxu0
        %v766 = vadd.f32 %v649, %v765
        %v767 = vpop.f32.mrb[0].mxu0
        %v768 = vpop.f32.mrb[0].mxu0
        %v769 = vadd.f32 %v649, %v768
        %v770 = vpop.f32.mrb[0].mxu0
        %771 = vmatprep.mubr.bf16.mxu0 0
        %772 = vmatmul.mubr.bf16.gmra.mrb[0].mxu0 %v625
        %v773 = vpop.f32.mrb[0].mxu0
        %v774 = vadd.f32 %v649, %v773
        %v775 = vpop.f32.mrb[0].mxu0
        %v776 = vpop.f32.mrb[0].mxu0
        %v777 = vadd.f32 %v649, %v776
        %v778 = vpop.f32.mrb[0].mxu0
        %779 = vmatprep.mubr.bf16.mxu0 0
        %780 = vmatmul.mubr.bf16.gmra.mrb[0].mxu0 %v626
        %v781 = vpop.f32.mrb[0].mxu0
        %v782 = vadd.f32 %v649, %v781
        %v783 = vpop.f32.mrb[0].mxu0
        %v784 = vpop.f32.mrb[0].mxu0
        %v785 = vadd.f32 %v649, %v784
        %v786 = vpop.f32.mrb[0].mxu0
        %787 = vmatprep.mubr.bf16.mxu0 0
        %788 = vmatmul.mubr.bf16.gmra.mrb[0].mxu0 %v627
        %v789 = vpop.f32.mrb[0].mxu0
        %v790 = vadd.f32 %v649, %v789
        %v791 = vpop.f32.mrb[0].mxu0
        %v792 = vpop.f32.mrb[0].mxu0
        %v793 = vadd.f32 %v649, %v792
        %v794 = vpop.f32.mrb[0].mxu0
        %795 = vdwg.mxu0
        %v796 = vxor.u32 %v734, 2147483648
        %v797 = vxor.u32 %v737, 2147483648
        %v798 = vxor.u32 %v742, 2147483648
        %v799 = vxor.u32 %v745, 2147483648
        %v800 = vxor.u32 %v750, 2147483648
        %v801 = vxor.u32 %v753, 2147483648
        %v802 = vxor.u32 %v758, 2147483648
        %v803 = vxor.u32 %v761, 2147483648
        %v804 = vxor.u32 %v766, 2147483648
        %v805 = vxor.u32 %v769, 2147483648
        %v806 = vxor.u32 %v774, 2147483648
        %v807 = vxor.u32 %v777, 2147483648
        %v808 = vxor.u32 %v782, 2147483648
        %v809 = vxor.u32 %v785, 2147483648
        %v810 = vxor.u32 %v790, 2147483648
        %v811 = vxor.u32 %v793, 2147483648
        %v812 = vmul.f32 %v796, 1.442695
        %v813 = vpow.pop %v812
        %v814 = vmul.f32 %v797, 1.442695
        %v815 = vpow.pop %v814
        %v816 = vmul.f32 %v798, 1.442695
        %v817 = vpow.pop %v816
        %v818 = vmul.f32 %v799, 1.442695
        %v819 = vpow.pop %v818
        %v820 = vmul.f32 %v800, 1.442695
        %v821 = vpow.pop %v820
        %v822 = vmul.f32 %v801, 1.442695
        %v823 = vpow.pop %v822
        %v824 = vmul.f32 %v802, 1.442695
        %v825 = vpow.pop %v824
        %v826 = vmul.f32 %v803, 1.442695
        %v827 = vpow.pop %v826
        %v828 = vmul.f32 %v804, 1.442695
        %v829 = vpow.pop %v828
        %v830 = vmul.f32 %v805, 1.442695
        %v831 = vpow.pop %v830
        %v832 = vmul.f32 %v806, 1.442695
        %v833 = vpow.pop %v832
        %v834 = vmul.f32 %v807, 1.442695
        %v835 = vpow.pop %v834
        %v836 = vmul.f32 %v808, 1.442695
        %v837 = vpow.pop %v836
        %v838 = vmul.f32 %v809, 1.442695
        %v839 = vpow.pop %v838
        %v840 = vmul.f32 %v810, 1.442695
        %v841 = vpow.pop %v840
        %v842 = vmul.f32 %v811, 1.442695
        %v843 = vpow.pop %v842
        %v844 = vadd.f32 %v813, 1.0
        %v845 = vadd.f32 %v815, 1.0
        %v846 = vadd.f32 %v817, 1.0
        %v847 = vadd.f32 %v819, 1.0
        %v848 = vadd.f32 %v821, 1.0
        %v849 = vadd.f32 %v823, 1.0
        %v850 = vadd.f32 %v825, 1.0
        %v851 = vadd.f32 %v827, 1.0
        %v852 = vadd.f32 %v829, 1.0
        %v853 = vadd.f32 %v831, 1.0
        %v854 = vadd.f32 %v833, 1.0
        %v855 = vadd.f32 %v835, 1.0
        %v856 = vadd.f32 %v837, 1.0
        %v857 = vadd.f32 %v839, 1.0
        %v858 = vadd.f32 %v841, 1.0
        %v859 = vadd.f32 %v843, 1.0
        %v860 = vrcp.pop %v844
        %v861 = vmul.f32 1.0, %v860
        %v862 = vrcp.pop %v845
        %v863 = vmul.f32 1.0, %v862
        %v864 = vrcp.pop %v846
        %v865 = vmul.f32 1.0, %v864
        %v866 = vrcp.pop %v847
        %v867 = vmul.f32 1.0, %v866
        %v868 = vrcp.pop %v848
        %v869 = vmul.f32 1.0, %v868
        %v870 = vrcp.pop %v849
        %v871 = vmul.f32 1.0, %v870
        %v872 = vrcp.pop %v850
        %v873 = vmul.f32 1.0, %v872
        %v874 = vrcp.pop %v851
        %v875 = vmul.f32 1.0, %v874
        %v876 = vrcp.pop %v852
        %v877 = vmul.f32 1.0, %v876
        %v878 = vrcp.pop %v853
        %v879 = vmul.f32 1.0, %v878
        %v880 = vrcp.pop %v854
        %v881 = vmul.f32 1.0, %v880
        %v882 = vrcp.pop %v855
        %v883 = vmul.f32 1.0, %v882
        %v884 = vrcp.pop %v856
        %v885 = vmul.f32 1.0, %v884
        %v886 = vrcp.pop %v857
        %v887 = vmul.f32 1.0, %v886
        %v888 = vrcp.pop %v858
        %v889 = vmul.f32 1.0, %v888
        %v890 = vrcp.pop %v859
        %v891 = vmul.f32 1.0, %v890
        %892 = vst [vmem:[%s272] sm:$0xff] %v861
        %893 = vst [vmem:[%s272 + $0x8] sm:$0xff] %v863
        %894 = vst [vmem:[%s272 + $0x10] sm:$0xff] %v865
        %895 = vst [vmem:[%s272 + $0x18] sm:$0xff] %v867
        %896 = vst [vmem:[%s272 + $0x20] sm:$0xff] %v869
        %897 = vst [vmem:[%s272 + $0x28] sm:$0xff] %v871
        %898 = vst [vmem:[%s272 + $0x30] sm:$0xff] %v873
        %899 = vst [vmem:[%s272 + $0x38] sm:$0xff] %v875
        %900 = vst [vmem:[%s272 + $0x40] sm:$0xff] %v877
        %901 = vst [vmem:[%s272 + $0x48] sm:$0xff] %v879
        %902 = vst [vmem:[%s272 + $0x50] sm:$0xff] %v881
        %903 = vst [vmem:[%s272 + $0x58] sm:$0xff] %v883
        %904 = vst [vmem:[%s272 + $0x60] sm:$0xff] %v885
        %905 = vst [vmem:[%s272 + $0x68] sm:$0xff] %v887
        %906 = vst [vmem:[%s272 + $0x70] sm:$0xff] %v889
        %907 = vst [vmem:[%s272 + $0x78] sm:$0xff] %v891
        %s908 = sand.u32 %s141, 1
        %s909 = scalar_lea.sflag [#allocation4], %s908
        %s910 = sand.u32 %s141, 1
        %s911 = smul.addr %s910, 128
        %s912 = scalar_lea.vmem [#allocation8], %s911
        // Predicated region
        $region53: #{tpu_custom_call.1} parent=39 // pred_check
          %p913 = pneg %p151
        $region54: #{tpu_custom_call.1} parent=39 // pred_check_branch
          %915 = sbr.rel (%p913) target = $region56
        $region55: #{tpu_custom_call.1} parent=39 // pred_region
          %s916 = smul.u32 16, %s23
          %s918 = ssub.s32 2048, 2048
          %919 = vsyncadd %s909, %s918
          %s920 = smul.addr %s916, 128
          %s921 = scalar_lea.hbm %s5, %s920
          %s922 = sshll.u32 %s912, 4
          %s923 = int_to_ptr.vmem [resolvable:$true] %s922
          %928 = dma.vmem_to_hbm [thread:$0]  %s923, 2048, %s921, %s909, 128, 128, 8
        $region56: #{tpu_custom_call.1} parent=39 // pred_fallthru
          _
      $region40: #{tpu_custom_call.1} parent=5 // pred_fallthru
        _
      %p929 = scmp.le.s32.totalorder 2, %s18
      // Predicated region
      $region57: #{tpu_custom_call.1} parent=5 // pred_check
        %p930 = pneg %p929
      $region58: #{tpu_custom_call.1} parent=5 // pred_check_branch
        %932 = sbr.rel (%p930) target = $region60
      $region59: #{tpu_custom_call.1} parent=5 // pred_region
        %s933 = ssub.s32 %s18, 2
        // Predicated region
        $region61: #{tpu_custom_call.1} parent=59 // pred_check
          %p934 = pneg %p157
        $region62: #{tpu_custom_call.1} parent=59 // pred_check_branch
          %936 = sbr.rel (%p934) target = $region64
        $region63: #{tpu_custom_call.1} parent=59 // pred_region
          %s937 = sand.u32 %s142, 1
          %s938 = scalar_lea.sflag [#allocation4], %s937
          %s939 = sand.u32 %s142, 1
          %s940 = smul.addr %s939, 128
          %s941 = scalar_lea.vmem [#allocation8], %s940
          %942 = dma.done %s938, 2048
        $region64: #{tpu_custom_call.1} parent=59 // pred_fallthru
          _
      $region60: #{tpu_custom_call.1} parent=5 // pred_fallthru
        _
    $region6: #{tpu_custom_call.1} parent=1 // loop_footer
      %s22 = sadd.s32 1, %s18
    $region7: #{tpu_custom_call.1} parent=1 // loop_footer_branch
      %17 = sbr.rel target = $region3
    $region8: #{tpu_custom_call.1} parent=1 // loop_exit
      _
    %943 = vsyncpa [#allocation3], 1
    %s944 = scalar_lea.sflag [#allocation3], 1
    %945 = vsyncpa %s944, 1
    %946 = vsyncpa [#allocation6], 1
    %947 = vsyncpa [#allocation4], 1
    %s948 = scalar_lea.sflag [#allocation4], 1
    %949 = vsyncpa %s948, 1

</llo_original>
